<compile_context>
chip_gen: v5e
topology: v5e:2x2
jax: 0.10.0
libtpu: 0.0.40
codegen_flags: <defaults>
</compile_context>

<pallas_src>
import functools
import math

import jax
import jax.numpy as jnp
from jax.experimental import pallas as pl
from jax.experimental.pallas import tpu as pltpu

_LANE = 128
_VMEM_LIMIT_BYTES = 48 * 1024 * 1024   # scoped VMEM; safe on v5e/v6e (128 MiB) and v7x (64 MiB/TC)
_MAX_IN_BLOCK_BYTES = 8 * 1024 * 1024  # per streamed input block (Pallas double-buffers it)


def _round_up(x, m):
    return ((x + m - 1) // m) * m


def _sublane(dtype):
    # sub-32-bit dtypes pack along sublanes: f32 -> 8, bf16 -> 16, int8/fp8 -> 32
    return 8 * max(1, 4 // jnp.dtype(dtype).itemsize)


def _pick_batch_tile(B):
    # block dim == full array dim is always layout-legal; for big B use 128-row
    # tiles (multiple of every sublane count) and let Pallas handle the ragged
    # last block (out-of-bounds output rows are dropped).
    return B if B <= 128 else 128


def _pick_feature_split(D, nb):
    # v7x has 2 TensorCores; 'parallel' grid axes are sharded across them.  When
    # the batch axis has a single block, split the (per-feature independent)
    # reduction along D so the second core is not idle.  Each slab must keep the
    # lane dim a multiple of 128.
    if nb == 1 and D >= 2 * _LANE and D % (2 * _LANE) == 0:
        return D // 2, 2
    return D, 1


def _pick_seq_tile(S, row_bytes, dtype, reserved_bytes):
    """row_bytes = bytes of one (TB, 1, TD) slice of the streamed block."""
    sub = _sublane(dtype)
    budget = max(_VMEM_LIMIT_BYTES - reserved_bytes, 2 * sub * row_bytes)
    cap = min(_MAX_IN_BLOCK_BYTES, budget // 2)          # input is double-buffered
    ts = max(sub, (cap // max(1, row_bytes)) // sub * sub)
    if ts >= S:
        return S                                         # full-dim block, no ragged tile
    return ts


# ----------------------------- kernels -------------------------------------


def _pool_kernel(x_ref, o_ref, acc_ref, *, op, rem, inv_s):
    # x_ref: (TB, TS, TD) ; o_ref: (TB, TD) ; acc_ref: (TB, TD) f32
    # grid = (batch blocks, feature blocks, seq blocks); seq axis is axis 2.
    s = pl.program_id(2)
    ns = pl.num_programs(2)

    @pl.when(s == 0)
    def _():
        if op == "sum":
            acc_ref[...] = jnp.zeros_like(acc_ref)
        else:
            acc_ref[...] = jnp.full_like(acc_ref, -jnp.inf)

    def accumulate(x):
        if op == "sum":
            # accumulate in f32 without materializing a full-block f32 copy
            acc_ref[...] += jnp.sum(x, axis=1, dtype=jnp.float32)
        else:
            # max is exact in the input dtype; widen only the (TB, TD) result
            acc_ref[...] = jnp.maximum(acc_ref[...],
                                       jnp.max(x, axis=1).astype(jnp.float32))

    if rem == 0:
        accumulate(x_ref[...])
    else:
        @pl.when(s != ns - 1)
        def _():
            accumulate(x_ref[...])

        @pl.when(s == ns - 1)
        def _():
            # ragged last seq tile: statically slice off the out-of-bounds rows
            accumulate(x_ref[:, :rem, :])

    @pl.when(s == ns - 1)
    def _():
        res = acc_ref[...]
        if op == "sum":
            res = res * inv_s
        o_ref[...] = res.astype(o_ref.dtype)


def _gcn_kernel(x_ref, w_ref, b_ref, o_ref, acc_ref, *, rem):
    # x_ref: (TB, TS, D) ; w_ref: (D, O) resident ; b_ref: (1, O) resident
    # o_ref: (TB, O) ; acc_ref: (TB, D) f32 running max.  Seq axis is grid axis 1.
    s = pl.program_id(1)
    ns = pl.num_programs(1)

    @pl.when(s == 0)
    def _():
        acc_ref[...] = jnp.full_like(acc_ref, -jnp.inf)

    def accumulate(x):
        acc_ref[...] = jnp.maximum(acc_ref[...],
                                   jnp.max(x, axis=1).astype(jnp.float32))

    if rem == 0:
        accumulate(x_ref[...])
    else:
        @pl.when(s != ns - 1)
        def _():
            accumulate(x_ref[...])

        @pl.when(s == ns - 1)
        def _():
            accumulate(x_ref[:, :rem, :])

    @pl.when(s == ns - 1)
    def _():
        lhs = acc_ref[...]
        if w_ref.dtype != jnp.float32:
            # bf16 x bf16 -> f32 is the full-rate MXU path (max pool is exact in bf16)
            lhs = lhs.astype(w_ref.dtype)
        o_ref[...] = (
            jnp.dot(lhs, w_ref[...], preferred_element_type=jnp.float32)
            + b_ref[...].astype(jnp.float32)
        ).astype(o_ref.dtype)


# ----------------------------- wrapper --------------------------------------


def aggregator_forward(inputs, weight, bias, aggr_method="mean", *, seq_tile=None):
    """inputs: (B, S, D) ; weight: (D, O) ; bias: (O,).  seq_tile is a test hook."""
    B, S, D = inputs.shape
    itemsize = jnp.dtype(inputs.dtype).itemsize

    if aggr_method in ("mean", "max"):
        TB = _pick_batch_tile(B)
        nb = pl.cdiv(B, TB)
        TD, nd = _pick_feature_split(D, nb)
        reserved = TB * TD * 4 + 2 * TB * TD * itemsize      # acc scratch + out buffers
        TS = seq_tile or _pick_seq_tile(S, TB * TD * itemsize, inputs.dtype, reserved)
        ns = pl.cdiv(S, TS)
        grid = (nb, nd, ns)

        if aggr_method == "mean":
            kernel = functools.partial(_pool_kernel, op="sum", rem=S % TS, inv_s=1.0 / S)
        else:
            # NOTE: PyTorch's 'max' branch also evaluates self.fc(inputs) and
            # discards the result (dead compute); skipped here.
            kernel = functools.partial(_pool_kernel, op="max", rem=S % TS, inv_s=1.0)

        return pl.pallas_call(
            kernel,
            grid=grid,
            in_specs=[pl.BlockSpec((TB, TS, TD), lambda b, d, s: (b, s, d))],
            out_specs=pl.BlockSpec((TB, TD), lambda b, d, s: (b, d)),
            out_shape=jax.ShapeDtypeStruct((B, D), inputs.dtype),
            scratch_shapes=[pltpu.VMEM((TB, TD), jnp.float32)],
            compiler_params=pltpu.CompilerParams(
                dimension_semantics=("parallel", "parallel", "arbitrary"),
                vmem_limit_bytes=_VMEM_LIMIT_BYTES),
            cost_estimate=pl.CostEstimate(
                flops=B * S * D,
                transcendentals=0,
                bytes_accessed=B * S * D * itemsize + B * D * itemsize),
        )(inputs)

    elif aggr_method == "gcn":
        O = weight.shape[1]
        w_itemsize = jnp.dtype(weight.dtype).itemsize
        TB = _pick_batch_tile(B)
        nb = pl.cdiv(B, TB)
        # Weight/bias are VMEM-resident but still double-buffered by the pipeline:
        # budget 2x their bytes before sizing the streamed block.
        # TODO(synk): tile O with an extra grid axis for weights too large to hold resident.
        reserved = (2 * (D * O + O) * w_itemsize
                    + TB * D * 4
                    + 2 * TB * O * itemsize)
        TS = seq_tile or _pick_seq_tile(S, TB * D * itemsize, inputs.dtype, reserved)
        ns = pl.cdiv(S, TS)
        grid = (nb, ns)
        bias2d = bias.reshape(1, O)

        kernel = functools.partial(_gcn_kernel, rem=S % TS)
        return pl.pallas_call(
            kernel,
            grid=grid,
            in_specs=[
                pl.BlockSpec((TB, TS, D), lambda b, s: (b, s, 0)),
                pl.BlockSpec((D, O), lambda b, s: (0, 0)),   # resident weight
                pl.BlockSpec((1, O), lambda b, s: (0, 0)),   # resident bias
            ],
            out_specs=pl.BlockSpec((TB, O), lambda b, s: (b, 0)),
            out_shape=jax.ShapeDtypeStruct((B, O), inputs.dtype),
            scratch_shapes=[pltpu.VMEM((TB, D), jnp.float32)],
            compiler_params=pltpu.CompilerParams(
                dimension_semantics=("parallel", "arbitrary"),
                vmem_limit_bytes=_VMEM_LIMIT_BYTES),
            cost_estimate=pl.CostEstimate(
                flops=B * S * D + 2 * B * D * O,
                transcendentals=0,
                bytes_accessed=(B * S * D * itemsize
                                + (D * O + O) * w_itemsize   # weight read once
                                + B * O * itemsize)),
        )(inputs, weight, bias2d)

    elif aggr_method == "lstm":
        # TODO(synk): nn.LSTM(input_dim, output_dim, num_layers=2, batch_first=True)
        # recurrence not implemented as a Pallas kernel.
        raise NotImplementedError("lstm aggregation not implemented in Pallas")

    else:
        raise ValueError(
            "Unknown aggr type, expected mean, max, gcn, or lstm, but got "
            f"{aggr_method}"
        )


# ----------------------------- parameter init -------------------------------


def init_fc_params(key, input_dim, output_dim, dtype=jnp.float32):
    """Matches nn.init.xavier_uniform_ on a (output_dim, input_dim) weight,
    bias = 0.  Returned weight is already transposed to (input_dim, output_dim)."""
    bound = math.sqrt(6.0 / (input_dim + output_dim))
    w = jax.random.uniform(
        key, (output_dim, input_dim), dtype=dtype, minval=-bound, maxval=bound
    )
    b = jnp.zeros((output_dim,), dtype=dtype)
    return w.T, b  # (D, O), (O,)


# ----------------------------- main ----------------------------------------

if __name__ == "__main__":
    key = jax.random.PRNGKey(0)
    k1, k2, k3, kw1, kw2 = jax.random.split(key, 5)

    ok = True

    def check(name, out, ref, atol=1e-5, rtol=1e-5):
        global ok
        out = jax.block_until_ready(out)
        if out.shape != ref.shape or not jnp.allclose(out, ref, atol=atol, rtol=rtol):
            ok = False
            err = (float(jnp.max(jnp.abs(out - ref)))
                   if out.shape == ref.shape else "shape mismatch")
            print(f"MISMATCH: {name}  err={err}")

    # --- case 1: small shapes matching the module defaults -------------------
    B, S, D, O = 2, 8, 32, 32
    x = jax.random.normal(k1, (B, S, D), dtype=jnp.float32)
    w, b = init_fc_params(kw1, D, O)
    check("mean", aggregator_forward(x, w, b, "mean"), jnp.mean(x, axis=1))
    check("max", aggregator_forward(x, w, b, "max"), jnp.max(x, axis=1))
    check("gcn", aggregator_forward(x, w, b, "gcn"), jnp.max(x, axis=1) @ w + b)

    # --- case 2: ragged sequence tiling (exercises the static-slice last tile)
    B, S, D, O = 3, 37, 64, 48
    x = jax.random.normal(k2, (B, S, D), dtype=jnp.float32)
    w, b = init_fc_params(kw2, D, O)
    check("mean/ragged", aggregator_forward(x, w, b, "mean", seq_tile=8),
          jnp.mean(x, axis=1))
    check("max/ragged", aggregator_forward(x, w, b, "max", seq_tile=8),
          jnp.max(x, axis=1))
    check("gcn/ragged", aggregator_forward(x, w, b, "gcn", seq_tile=8),
          jnp.max(x, axis=1) @ w + b)

    # --- case 3: feature-split parallel axis (2 blocks on the D axis) --------
    B, S, D = 2, 16, 256
    x = jax.random.normal(k3, (B, S, D), dtype=jnp.float32)
    check("mean/dsplit", aggregator_forward(x, None, None, "mean"), jnp.mean(x, axis=1))
    check("max/dsplit", aggregator_forward(x, None, None, "max"), jnp.max(x, axis=1))

    if ok:
        print("KERNEL_OK")
</pallas_src>

<mosaic_0001>
module attributes {stable_mosaic.version = 11 : i64} {
  func.func @_pool_kernel(%arg0: i32, %arg1: i32, %arg2: i32, %arg3: memref<2x8x32xf32, #tpu.memory_space<vmem>>, %arg4: memref<2x32xf32, #tpu.memory_space<vmem>>, %arg5: memref<2x32xf32, #tpu.memory_space<vmem>>) attributes {dimension_semantics = [#tpu.dimension_semantics<parallel>, #tpu.dimension_semantics<parallel>, #tpu.dimension_semantics<arbitrary>], iteration_bounds = array<i64: 1, 1, 1>, scalar_prefetch = 0 : i64, scratch_operands = 1 : i64, tpu.core_type = #tpu.core_type<tc>, window_params = [{transform_indices = @transform_0, window_bounds = array<i64: 2, 8, 32>}, {transform_indices = @transform_1, window_bounds = array<i64: 2, 32>}]} {
    %c0_i32 = arith.constant 0 : i32
    %0 = arith.cmpi eq, %arg2, %c0_i32 : i32
    %1 = arith.extui %0 : i1 to i32
    %c0_i32_0 = arith.constant 0 : i32
    %2 = arith.cmpi ne, %1, %c0_i32_0 : i32
    scf.if %2 {
      %cst_9 = arith.constant 0.000000e+00 : f32
      %11 = vector.broadcast %cst_9 : f32 to vector<2x32xf32>
      %c0_10 = arith.constant 0 : index
      %c0_11 = arith.constant 0 : index
      %12 = vector.load %arg5[%c0_10, %c0_11] : memref<2x32xf32, #tpu.memory_space<vmem>>, vector<2x32xf32>
      tpu.vector_store %arg5[%c0_10, %c0_11], %11 {strides = array<i32>} : memref<2x32xf32, #tpu.memory_space<vmem>>, vector<2x32xf32>,
    } else {
    }
    %c0 = arith.constant 0 : index
    %c0_1 = arith.constant 0 : index
    %c0_2 = arith.constant 0 : index
    %3 = vector.load %arg3[%c0, %c0_1, %c0_2] : memref<2x8x32xf32, #tpu.memory_space<vmem>>, vector<2x8x32xf32>
    %c0_3 = arith.constant 0 : index
    %c0_4 = arith.constant 0 : index
    %4 = vector.load %arg5[%c0_3, %c0_4] : memref<2x32xf32, #tpu.memory_space<vmem>>, vector<2x32xf32>
    %cst = arith.constant dense<0.000000e+00> : vector<2x32xf32>
    %5 = vector.multi_reduction <add>, %3, %cst [1] : vector<2x8x32xf32> to vector<2x32xf32>
    %6 = arith.addf %4, %5 : vector<2x32xf32>
    %c0_5 = arith.constant 0 : index
    %c0_6 = arith.constant 0 : index
    %7 = vector.load %arg5[%c0_5, %c0_6] : memref<2x32xf32, #tpu.memory_space<vmem>>, vector<2x32xf32>
    tpu.vector_store %arg5[%c0_5, %c0_6], %6 {strides = array<i32>} : memref<2x32xf32, #tpu.memory_space<vmem>>, vector<2x32xf32>,
    %c0_i32_7 = arith.constant 0 : i32
    %8 = arith.cmpi eq, %arg2, %c0_i32_7 : i32
    %9 = arith.extui %8 : i1 to i32
    %c0_i32_8 = arith.constant 0 : i32
    %10 = arith.cmpi ne, %9, %c0_i32_8 : i32
    scf.if %10 {
      %c0_9 = arith.constant 0 : index
      %c0_10 = arith.constant 0 : index
      %11 = vector.load %arg5[%c0_9, %c0_10] : memref<2x32xf32, #tpu.memory_space<vmem>>, vector<2x32xf32>
      %cst_11 = arith.constant 1.250000e-01 : f32
      %12 = vector.broadcast %cst_11 : f32 to vector<2x32xf32>
      %13 = arith.mulf %11, %12 : vector<2x32xf32>
      %c0_12 = arith.constant 0 : index
      %c0_13 = arith.constant 0 : index
      %14 = vector.load %arg4[%c0_12, %c0_13] : memref<2x32xf32, #tpu.memory_space<vmem>>, vector<2x32xf32>
      tpu.vector_store %arg4[%c0_12, %c0_13], %13 {strides = array<i32>} : memref<2x32xf32, #tpu.memory_space<vmem>>, vector<2x32xf32>,
    } else {
    }
    return
  }
  func.func @transform_0(%arg0: i32, %arg1: i32, %arg2: i32) -> (i32, i32, i32) {
    %c0_i32 = arith.constant 0 : i32
    return %arg0, %arg2, %arg1 : i32, i32, i32
  }
  func.func @transform_1(%arg0: i32, %arg1: i32, %arg2: i32) -> (i32, i32) {
    %c0_i32 = arith.constant 0 : i32
    return %arg0, %arg1 : i32, i32
  }
}

</mosaic_0001>

<llo_original>
// kernel: tpu_custom_call.1
$region0: #{tpu_custom_call.1}
  #allocation0 [shape = 'u32[]', space=smem, size = 0x4, offset = 0x4, fixed_abs, tag = 'smem constant byte address 0x4 - core index']
  #allocation1 [shape = 'u32[72,128]{1,0:T(1,128)}', space=vmem, size = 0x9000, scoped, tag = 'internal scratch']
  #allocation2 [shape = 'f32[2,32]{1,0:T(2,128)}', space=vmem, size = 0x400, scoped, tag = 'scratch operand']
  %s0 = inlined_call_operand.hbm [shape: f32[2,8,32], index: 0, kind: input, shape index: {}]
  %s1 = inlined_call_operand.hbm [shape: f32[2,32], index: 1, kind: output, shape index: {}]
  %s2 = sld [smem:[#allocation0]]
  $region26: #{tpu_custom_call.1} parent=0
    _
  %s4 = ssub.s32 1, %s2
  %s5 = scalar_select 0, %s4, %s2
  $region1: #{tpu_custom_call.1} parent=0
    #allocation3 [shape = 'u8[8192]{0}', space=vmem, size = 0x2000, scoped, tag = 'input window, operand 0, single buffered']
    #allocation4 [shape = 's32[1]{0}', space=sflag, size = 0x4, scoped, tag = 'scoped memory for tpu_custom_call.1']
    #allocation5 [shape = 's32[1]{0}', space=sflag, size = 0x4, scoped, tag = 'scoped memory for tpu_custom_call.1']
    #allocation6 [shape = 'u8[1024]{0}', space=vmem, size = 0x400, scoped, tag = 'output window, operand 0, single buffered']
    %6 = vsyncpa [#allocation4], 0
    %7 = vsyncpa [#allocation5], 0
    // Predicated region
    $region2: #{tpu_custom_call.1} parent=1 // pred_check
      _
    $region3: #{tpu_custom_call.1} parent=1 // pred_check_branch
      %9 = sbr.rel (0) target = $region5
    $region4: #{tpu_custom_call.1} parent=1 // pred_region
      %11 = vsyncadd [#allocation4], 0
      %s12 = sshll.u32 %s0, 4
      %s13 = int_to_ptr.hbm [resolvable:$true] %s12
      %s14 = sshll.u32 [#allocation3], 4
      %s15 = int_to_ptr.vmem [resolvable:$true] %s14
      %20 = dma.hbm_to_vmem [thread:$0]  %s13, 256, %s15, [#allocation4], 128, 128, 8
    $region5: #{tpu_custom_call.1} parent=1 // pred_fallthru
      _
    // Predicated region
    $region6: #{tpu_custom_call.1} parent=1 // pred_check
      _
    $region7: #{tpu_custom_call.1} parent=1 // pred_check_branch
      %22 = sbr.rel (0) target = $region9
    $region8: #{tpu_custom_call.1} parent=1 // pred_region
      %24 = dma.done [#allocation4], 256
    $region9: #{tpu_custom_call.1} parent=1 // pred_fallthru
      _
    %p25 = scmp.eq.s32.totalorder 0, 0
    // Predicated region
    $region10: #{tpu_custom_call.1} parent=1 // pred_check
      %p26 = pneg %p25
    $region11: #{tpu_custom_call.1} parent=1 // pred_check_branch
      %28 = sbr.rel (%p26) target = $region13
    $region12: #{tpu_custom_call.1} parent=1 // pred_region
      %vm29 = vcmask 254976
      %30 = vst.msk [vmem:[#allocation2] sm:$0x3] %vm29, 0.0
    $region13: #{tpu_custom_call.1} parent=1 // pred_fallthru
      _
    %v31 = vld [vmem:[#allocation3] sm:$0xff]
    %v32 = vld [vmem:[#allocation3 + $0x8] sm:$0xff]
    %v33 = vld [vmem:[#allocation2] sm:$0x3]
    %vm34 = vcmask 261120
    %v35 = vsel %vm34, %v31, 0.0
    %v36 = vrot.slane %v35, 4
    %v37 = vadd.f32 %v35, %v36
    %v38 = vrot.slane %v37, 2
    %v39 = vadd.f32 %v37, %v38
    %v40 = vrot.slane %v39, 1
    %v41 = vadd.f32 %v39, %v40
    %v42 = vsel %vm34, %v32, 0.0
    %v43 = vrot.slane %v42, 4
    %v44 = vadd.f32 %v42, %v43
    %v45 = vrot.slane %v44, 2
    %v46 = vadd.f32 %v44, %v45
    %v47 = vrot.slane %v46, 1
    %v48 = vadd.f32 %v46, %v47
    %vm51 = vcmask 1041409
    %v52 = vsel %vm51, %v48, %v41
    %v54 = vadd.f32 %v33, %v52
    %vm55 = vcmask 254976
    %56 = vst.msk [vmem:[#allocation2] sm:$0x3] %vm55, %v54
    // Predicated region
    $region14: #{tpu_custom_call.1} parent=1 // pred_check
      %p57 = pneg %p25
    $region15: #{tpu_custom_call.1} parent=1 // pred_check_branch
      %59 = sbr.rel (%p57) target = $region17
    $region16: #{tpu_custom_call.1} parent=1 // pred_region
      %v60 = vld [vmem:[#allocation2] sm:$0x3]
      %v61 = vmul.f32 %v60, 0.125
      %62 = vst.msk [vmem:[#allocation6] sm:$0x3] %vm55, %v61
    $region17: #{tpu_custom_call.1} parent=1 // pred_fallthru
      _
    // Predicated region
    $region18: #{tpu_custom_call.1} parent=1 // pred_check
      _
    $region19: #{tpu_custom_call.1} parent=1 // pred_check_branch
      %64 = sbr.rel (0) target = $region21
    $region20: #{tpu_custom_call.1} parent=1 // pred_region
      %66 = vsyncadd [#allocation5], 0
      %s68 = sshll.u32 [#allocation6], 4
      %s69 = int_to_ptr.vmem [resolvable:$true] %s68
      %s70 = sshll.u32 %s1, 4
      %s71 = int_to_ptr.hbm [resolvable:$true] %s70
      %73 = dma.vmem_to_hbm [thread:$0]  %s69, 32, %s71, [#allocation5]
    $region21: #{tpu_custom_call.1} parent=1 // pred_fallthru
      _
    // Predicated region
    $region22: #{tpu_custom_call.1} parent=1 // pred_check
      _
    $region23: #{tpu_custom_call.1} parent=1 // pred_check_branch
      %75 = sbr.rel (0) target = $region25
    $region24: #{tpu_custom_call.1} parent=1 // pred_region
      %77 = dma.done [#allocation5], 32
    $region25: #{tpu_custom_call.1} parent=1 // pred_fallthru
      _
    %78 = vsyncpa [#allocation4], 1
    %79 = vsyncpa [#allocation5], 1

</llo_original>
